<compile_context>
chip_gen: v7x
topology: tpu7x:2x2x1
jax: 0.10.0
libtpu: 0.0.40
codegen_flags: <defaults>
</compile_context>

<pallas_src>
import numpy as np
import jax
import jax.numpy as jnp
from jax.experimental import pallas as pl
from jax.experimental.pallas import tpu as pltpu


def _round_up(x, m):
    return (x + m - 1) // m * m


# ----------------------------------------------------------------------------
# Deterministic "module init" (mirrors TpsGridGen.__init__ / compute_L_inverse)
# ----------------------------------------------------------------------------
def _tps_numpy_constants(out_h, out_w, grid_size, reg_factor=0.0):
    # sampling grid (grid_X varies along width, grid_Y along height)
    gx, gy = np.meshgrid(np.linspace(-1.0, 1.0, out_w),
                         np.linspace(-1.0, 1.0, out_h))
    gx = gx.astype(np.float64)          # (H, W)
    gy = gy.astype(np.float64)          # (H, W)

    # control points (same ordering as the PyTorch module)
    axis_coords = np.linspace(-1.0, 1.0, grid_size)
    N = grid_size * grid_size
    P_Y, P_X = np.meshgrid(axis_coords, axis_coords)
    P_X = np.reshape(P_X, (-1,)).astype(np.float64)   # (N,)
    P_Y = np.reshape(P_Y, (-1,)).astype(np.float64)   # (N,)

    # compute_L_inverse
    Xmat = np.tile(P_X[:, None], (1, N))
    Ymat = np.tile(P_Y[:, None], (1, N))
    P_dist_sq = (Xmat - Xmat.T) ** 2 + (Ymat - Ymat.T) ** 2
    P_dist_sq[P_dist_sq == 0] = 1.0
    K = P_dist_sq * np.log(P_dist_sq)
    if reg_factor != 0:
        K = K + np.eye(N) * reg_factor
    O = np.ones((N, 1))
    Z = np.zeros((3, 3))
    P = np.concatenate([O, P_X[:, None], P_Y[:, None]], axis=1)      # (N, 3)
    L = np.concatenate([np.concatenate([K, P], axis=1),
                        np.concatenate([P.T, Z], axis=1)], axis=0)   # (N+3, N+3)
    Li = np.linalg.inv(L)
    LiN = Li[:, :N]                                                  # (N+3, N)
    return gx, gy, LiN, P_X, P_Y, N


def _folded_basis(out_h, out_w, grid_size):
    """Return M_pad (K_pad, H*W) f32 such that warped_plane = theta_part @ M_pad."""
    gx, gy, LiN, PX, PY, N = _tps_numpy_constants(out_h, out_w, grid_size)
    HW = out_h * out_w
    x = gx.reshape(-1)                  # (HW,)
    y = gy.reshape(-1)

    # batch-independent radial basis U_n(p) = r^2 * log(r^2), exact zero-guard in f64
    dsq = (x[None, :] - PX[:, None]) ** 2 + (y[None, :] - PY[:, None]) ** 2  # (N, HW)
    dsq[dsq == 0.0] = 1.0
    U = dsq * np.log(dsq)                                                    # (N, HW)

    # augmented basis matching the coefficient vector c = LiN @ theta:
    #   first N entries -> RBF weights W, last 3 -> affine [1, x, y]
    U_aug = np.concatenate([U, np.ones((1, HW)), x[None, :], y[None, :]], axis=0)  # (N+3, HW)

    M = LiN.T @ U_aug                    # (N, HW), folded in float64

    K_pad = _round_up(N, 8)              # pad contraction dim for clean MXU tiling
    M_pad = np.zeros((K_pad, HW), np.float32)
    M_pad[:N, :] = M.astype(np.float32)
    return M_pad, N, K_pad


# ----------------------------------------------------------------------------
# Pallas kernel: two small MXU matmuls per batch block, lane-dense output slab
# ----------------------------------------------------------------------------
def _tps_kernel(tx_ref, ty_ref, m_ref, out_ref):
    m = m_ref[...]                                   # (K_pad, HW) constant basis
    out_ref[0] = jnp.dot(tx_ref[...], m, preferred_element_type=jnp.float32)
    out_ref[1] = jnp.dot(ty_ref[...], m, preferred_element_type=jnp.float32)


# ----------------------------------------------------------------------------
# Wrapper (equivalent of TpsGridGen.forward)
# ----------------------------------------------------------------------------
def tps_grid_gen(theta, *, out_h=16, out_w=16, grid_size=3):
    M_pad, N, K_pad = _folded_basis(out_h, out_w, grid_size)
    HW = out_h * out_w

    theta = jnp.asarray(theta, jnp.float32)
    if theta.ndim == 4:                  # (B, 2N, 1, 1) -> (B, 2N)
        theta = theta.reshape(theta.shape[0], theta.shape[1])
    B = theta.shape[0]
    assert theta.shape[1] == 2 * N

    # batch lives on the sublane axis; block it so each grid step does real work
    B_BLK = min(256, _round_up(B, 8))
    B_pad = _round_up(B, B_BLK)
    n_blocks = B_pad // B_BLK

    # split + zero-pad theta (pad batch rows and the K dimension)
    tx = jnp.zeros((B_pad, K_pad), jnp.float32).at[:B, :N].set(theta[:, :N])
    ty = jnp.zeros((B_pad, K_pad), jnp.float32).at[:B, :N].set(theta[:, N:])

    out = pl.pallas_call(
        _tps_kernel,
        grid=(n_blocks,),
        in_specs=[
            pl.BlockSpec((B_BLK, K_pad), lambda i: (i, 0)),   # theta_X block
            pl.BlockSpec((B_BLK, K_pad), lambda i: (i, 0)),   # theta_Y block
            pl.BlockSpec((K_pad, HW), lambda i: (0, 0)),      # folded basis (const)
        ],
        out_specs=pl.BlockSpec((2, B_BLK, HW), lambda i: (0, i, 0)),
        out_shape=jax.ShapeDtypeStruct((2, B_pad, HW), jnp.float32),
        compiler_params=pltpu.CompilerParams(
            dimension_semantics=("parallel",)),
    )(tx, ty, jnp.asarray(M_pad))

    # (2, B, HW) -> (B, H, W, 2) : match PyTorch output layout (interleave in XLA)
    return jnp.transpose(out[:, :B, :], (1, 2, 0)).reshape(B, out_h, out_w, 2)


# ----------------------------------------------------------------------------
# Pure-numpy reference (mirrors the PyTorch forward, f32 arithmetic)
# ----------------------------------------------------------------------------
def tps_grid_gen_ref(theta, *, out_h=16, out_w=16, grid_size=3):
    gx, gy, LiN, PX, PY, N = _tps_numpy_constants(out_h, out_w, grid_size)
    gx = gx.astype(np.float32)
    gy = gy.astype(np.float32)
    LiN = LiN.astype(np.float32)
    PX = PX.astype(np.float32)
    PY = PY.astype(np.float32)

    theta = np.asarray(theta, np.float32).reshape(theta.shape[0], -1)
    B = theta.shape[0]
    out = np.zeros((B, out_h, out_w, 2), np.float32)
    for b in range(B):
        cX = LiN @ theta[b, :N]
        cY = LiN @ theta[b, N:]
        x, y = gx, gy
        accx = cX[N] + cX[N + 1] * x + cX[N + 2] * y
        accy = cY[N] + cY[N + 1] * x + cY[N + 2] * y
        for n in range(N):
            dsq = (x - PX[n]) ** 2 + (y - PY[n]) ** 2
            dsq = np.where(dsq == 0, 1.0, dsq).astype(np.float32)
            u = dsq * np.log(dsq)
            accx = accx + cX[n] * u
            accy = accy + cY[n] * u
        out[b, :, :, 0] = accx
        out[b, :, :, 1] = accy
    return out


if __name__ == "__main__":
    B, grid_size = 2, 3
    N = grid_size * grid_size
    out_h = out_w = 16

    # theta = small perturbation around the identity TPS (target = control pts)
    _, _, _, PX, PY, _ = _tps_numpy_constants(out_h, out_w, grid_size)
    base = jnp.asarray(np.concatenate([PX, PY]).astype(np.float32))
    key = jax.random.PRNGKey(0)
    theta = base[None, :] + 0.1 * jax.random.normal(key, (B, 2 * N), jnp.float32)

    out = tps_grid_gen(theta, out_h=out_h, out_w=out_w, grid_size=grid_size)
    out = jax.block_until_ready(out)

    ref = tps_grid_gen_ref(np.asarray(theta), out_h=out_h, out_w=out_w,
                           grid_size=grid_size)
    np.testing.assert_allclose(np.asarray(out), ref, rtol=1e-4, atol=2e-4)

    print("KERNEL_OK")
</pallas_src>

<mosaic_0001>
module attributes {stable_mosaic.version = 11 : i64} {
  func.func @_tps_kernel(%arg0: i32, %arg1: memref<8x16xf32, #tpu.memory_space<vmem>>, %arg2: memref<8x16xf32, #tpu.memory_space<vmem>>, %arg3: memref<16x256xf32, #tpu.memory_space<vmem>>, %arg4: memref<2x8x256xf32, #tpu.memory_space<vmem>>) attributes {dimension_semantics = [#tpu.dimension_semantics<parallel>], iteration_bounds = array<i64: 1>, scalar_prefetch = 0 : i64, scratch_operands = 0 : i64, tpu.core_type = #tpu.core_type<tc>, window_params = [{transform_indices = @transform_0, window_bounds = array<i64: 8, 16>}, {transform_indices = @transform_1, window_bounds = array<i64: 8, 16>}, {pipeline_mode = #tpu.pipeline_mode<synchronous>, transform_indices = @transform_2, window_bounds = array<i64: 16, 256>}, {transform_indices = @transform_3, window_bounds = array<i64: 2, 8, 256>}]} {
    %c0 = arith.constant 0 : index
    %c0_0 = arith.constant 0 : index
    %0 = vector.load %arg3[%c0, %c0_0] : memref<16x256xf32, #tpu.memory_space<vmem>>, vector<16x256xf32>
    %c0_1 = arith.constant 0 : index
    %c0_2 = arith.constant 0 : index
    %1 = vector.load %arg1[%c0_1, %c0_2] : memref<8x16xf32, #tpu.memory_space<vmem>>, vector<8x16xf32>
    %cst = arith.constant dense<0.000000e+00> : vector<8x256xf32>
    %2 = tpu.matmul %1, %0, %cst {dimension_numbers = #tpu.dot_dimension_numbers<[1], [0], [0], [1], [0, 0, 1, 1], [], []>} : vector<8x16xf32>, vector<16x256xf32>, vector<8x256xf32> -> vector<8x256xf32>
    %c0_3 = arith.constant 0 : index
    %c0_4 = arith.constant 0 : index
    %c0_5 = arith.constant 0 : index
    %3 = vector.load %arg4[%c0_3, %c0_4, %c0_5] : memref<2x8x256xf32, #tpu.memory_space<vmem>>, vector<1x8x256xf32>
    %4 = vector.shape_cast %3 : vector<1x8x256xf32> to vector<8x256xf32>
    %5 = vector.shape_cast %2 : vector<8x256xf32> to vector<1x8x256xf32>
    tpu.vector_store %arg4[%c0_3, %c0_4, %c0_5], %5 {strides = array<i32>} : memref<2x8x256xf32, #tpu.memory_space<vmem>>, vector<1x8x256xf32>,
    %c0_6 = arith.constant 0 : index
    %c0_7 = arith.constant 0 : index
    %6 = vector.load %arg2[%c0_6, %c0_7] : memref<8x16xf32, #tpu.memory_space<vmem>>, vector<8x16xf32>
    %cst_8 = arith.constant dense<0.000000e+00> : vector<8x256xf32>
    %7 = tpu.matmul %6, %0, %cst_8 {dimension_numbers = #tpu.dot_dimension_numbers<[1], [0], [0], [1], [0, 0, 1, 1], [], []>} : vector<8x16xf32>, vector<16x256xf32>, vector<8x256xf32> -> vector<8x256xf32>
    %c1 = arith.constant 1 : index
    %c0_9 = arith.constant 0 : index
    %c0_10 = arith.constant 0 : index
    %8 = vector.load %arg4[%c1, %c0_9, %c0_10] : memref<2x8x256xf32, #tpu.memory_space<vmem>>, vector<1x8x256xf32>
    %9 = vector.shape_cast %8 : vector<1x8x256xf32> to vector<8x256xf32>
    %10 = vector.shape_cast %7 : vector<8x256xf32> to vector<1x8x256xf32>
    tpu.vector_store %arg4[%c1, %c0_9, %c0_10], %10 {strides = array<i32>} : memref<2x8x256xf32, #tpu.memory_space<vmem>>, vector<1x8x256xf32>,
    return
  }
  func.func @transform_0(%arg0: i32) -> (i32, i32) {
    %c0_i32 = arith.constant 0 : i32
    %c0_i32_0 = arith.constant 0 : i32
    return %arg0, %c0_i32 : i32, i32
  }
  func.func @transform_1(%arg0: i32) -> (i32, i32) {
    %c0_i32 = arith.constant 0 : i32
    %c0_i32_0 = arith.constant 0 : i32
    return %arg0, %c0_i32 : i32, i32
  }
  func.func @transform_2(%arg0: i32) -> (i32, i32) {
    %c0_i32 = arith.constant 0 : i32
    %c0_i32_0 = arith.constant 0 : i32
    %c0_i32_1 = arith.constant 0 : i32
    return %c0_i32, %c0_i32_0 : i32, i32
  }
  func.func @transform_3(%arg0: i32) -> (i32, i32, i32) {
    %c0_i32 = arith.constant 0 : i32
    %c0_i32_0 = arith.constant 0 : i32
    %c0_i32_1 = arith.constant 0 : i32
    return %c0_i32, %arg0, %c0_i32_0 : i32, i32, i32
  }
}

</mosaic_0001>

<llo_original>
// kernel: tpu_custom_call.1
$region0: #{tpu_custom_call.1}
  #allocation0 [shape = 'u32[]', space=smem, size = 0x4, offset = 0x4, fixed_abs, tag = 'smem constant byte address 0x4 - core index']
  #allocation1 [shape = 'u32[144,128]{1,0:T(1,128)}', space=vmem, size = 0x12000, scoped, tag = 'internal scratch']
  %s0 = inlined_call_operand.hbm [shape: f32[8,16], index: 0, kind: input, shape index: {}]
  %s1 = inlined_call_operand.hbm [shape: f32[8,16], index: 1, kind: input, shape index: {}]
  %s2 = inlined_call_operand.hbm [shape: f32[16,256], index: 2, kind: input, shape index: {}]
  %s3 = inlined_call_operand.hbm [shape: f32[2,8,256], index: 3, kind: output, shape index: {}]
  %s4 = sld [smem:[#allocation0]]
  $region34: #{tpu_custom_call.1} parent=0
    _
  %s6 = ssub.s32 1, %s4
  %s7 = scalar_select 0, %s6, %s4
  $region1: #{tpu_custom_call.1} parent=0
    #allocation2 [shape = 'u8[4096]{0}', space=vmem, size = 0x1000, scoped, tag = 'input window, operand 0, single buffered']
    #allocation3 [shape = 's32[1]{0}', space=sflag, size = 0x4, scoped, tag = 'scoped memory for tpu_custom_call.1']
    #allocation4 [shape = 's32[1]{0}', space=sflag, size = 0x4, scoped, tag = 'scoped memory for tpu_custom_call.1']
    #allocation5 [shape = 'u8[4096]{0}', space=vmem, size = 0x1000, scoped, tag = 'input window, operand 1, single buffered']
    #allocation6 [shape = 's32[1]{0}', space=sflag, size = 0x4, scoped, tag = 'scoped memory for tpu_custom_call.1']
    #allocation7 [shape = 'u8[16384]{0}', space=vmem, size = 0x4000, scoped, tag = 'input window, operand 2, single buffered']
    #allocation8 [shape = 'u8[16384]{0}', space=vmem, size = 0x4000, scoped, tag = 'output window, operand 0, single buffered']
    %8 = vsyncpa [#allocation3], 0
    %9 = vsyncpa [#allocation6], 0
    %10 = vsyncpa [#allocation4], 0
    // Predicated region
    $region2: #{tpu_custom_call.1} parent=1 // pred_check
      _
    $region3: #{tpu_custom_call.1} parent=1 // pred_check_branch
      %12 = sbr.rel (0) target = $region5
    $region4: #{tpu_custom_call.1} parent=1 // pred_region
      %s14 = ssub.s32 128, 128
      %15 = vsyncadd [#allocation3], %s14
      %s17 = sshll.u32 [#allocation2], 4
      %s18 = int_to_ptr.vmem [resolvable:$true] %s17
      %20 = dma.hbm_to_vmem [thread:$0]  %s0, 128, %s18, [#allocation3]
    $region5: #{tpu_custom_call.1} parent=1 // pred_fallthru
      _
    // Predicated region
    $region6: #{tpu_custom_call.1} parent=1 // pred_check
      _
    $region7: #{tpu_custom_call.1} parent=1 // pred_check_branch
      %22 = sbr.rel (0) target = $region9
    $region8: #{tpu_custom_call.1} parent=1 // pred_region
      %s24 = ssub.s32 128, 128
      %25 = vsyncadd [#allocation6], %s24
      %s27 = sshll.u32 [#allocation5], 4
      %s28 = int_to_ptr.vmem [resolvable:$true] %s27
      %30 = dma.hbm_to_vmem [thread:$0]  %s1, 128, %s28, [#allocation6]
    $region9: #{tpu_custom_call.1} parent=1 // pred_fallthru
      _
    // Predicated region
    $region10: #{tpu_custom_call.1} parent=1 // pred_check
      _
    $region11: #{tpu_custom_call.1} parent=1 // pred_check_branch
      %32 = sbr.rel (0) target = $region13
    $region12: #{tpu_custom_call.1} parent=1 // pred_region
      %s34 = ssub.s32 512, 512
      %35 = vsyncadd [#allocation6], %s34
      %s36 = sshll.u32 [#allocation7], 4
      %s37 = int_to_ptr.vmem [resolvable:$true] %s36
      %42 = dma.hbm_to_vmem [thread:$0]  %s2, 512, %s37, [#allocation6], 256, 256, 16
    $region13: #{tpu_custom_call.1} parent=1 // pred_fallthru
      _
    // Predicated region
    $region14: #{tpu_custom_call.1} parent=1 // pred_check
      _
    $region15: #{tpu_custom_call.1} parent=1 // pred_check_branch
      %44 = sbr.rel (0) target = $region17
    $region16: #{tpu_custom_call.1} parent=1 // pred_region
      %45 = dma.done [#allocation3], 128
    $region17: #{tpu_custom_call.1} parent=1 // pred_fallthru
      _
    // Predicated region
    $region18: #{tpu_custom_call.1} parent=1 // pred_check
      _
    $region19: #{tpu_custom_call.1} parent=1 // pred_check_branch
      %47 = sbr.rel (0) target = $region21
    $region20: #{tpu_custom_call.1} parent=1 // pred_region
      %48 = dma.done [#allocation6], 128
    $region21: #{tpu_custom_call.1} parent=1 // pred_fallthru
      _
    // Predicated region
    $region22: #{tpu_custom_call.1} parent=1 // pred_check
      _
    $region23: #{tpu_custom_call.1} parent=1 // pred_check_branch
      %50 = sbr.rel (0) target = $region25
    $region24: #{tpu_custom_call.1} parent=1 // pred_region
      %51 = dma.done [#allocation6], 512
    $region25: #{tpu_custom_call.1} parent=1 // pred_fallthru
      _
    %v52 = vld [vmem:[#allocation7] sm:$0xff]
    %v53 = vld [vmem:[#allocation7 + $0x8] sm:$0xff]
    %v54 = vld [vmem:[#allocation7 + $0x10] sm:$0xff]
    %v55 = vld [vmem:[#allocation7 + $0x18] sm:$0xff]
    %v56 = vld [vmem:[#allocation2] sm:$0xff]
    %vm57 = vcmask 130048
    %v59 = vsel %vm57, %v56, 0
    %61 = vmatprep.subr.mxu0 %v53
    %62 = vmatpush1.msra.mxu0 %v52
    %63 = vmatprep.subr.mxu0 %v55
    %64 = vmatpush1.msra.mxu0 %v54
    %65 = vmatprep.subr.mxu0 0.0
    %66 = vmatpush1.msra.mxu0 0.0
    %67 = vmatprep.subr.mxu0 0.0
    %68 = vmatpush1.msra.mxu0 0.0
    %69 = vmatprep.subr.mxu0 0.0
    %70 = vmatpush1.msra.mxu0 0.0
    %71 = vmatprep.subr.mxu0 0.0
    %72 = vmatpush1.msra.mxu0 0.0
    %73 = vmatprep.subr.mxu0 0.0
    %74 = vmatpush1.msra.mxu0 0.0
    %75 = vmatprep.subr.mxu0 0.0
    %76 = vmatpush1.msra.mxu0 0.0
    %77 = vmatprep.subr.mxu0 0.0
    %78 = vmatpush1.msra.mxu0 0.0
    %79 = vmatprep.subr.mxu0 0.0
    %80 = vmatpush1.msra.mxu0 0.0
    %81 = vmatprep.subr.mxu0 0.0
    %82 = vmatpush1.msra.mxu0 0.0
    %83 = vmatprep.subr.mxu0 0.0
    %84 = vmatpush1.msra.mxu0 0.0
    %85 = vmatprep.subr.mxu0 0.0
    %86 = vmatpush1.msra.mxu0 0.0
    %87 = vmatprep.subr.mxu0 0.0
    %88 = vmatpush1.msra.mxu0 0.0
    %89 = vmatprep.subr.mxu0 0.0
    %90 = vmatpush1.msra.mxu0 0.0
    %91 = vmatprep.subr.mxu0 0.0
    %92 = vmatpush1.msra.mxu0 0.0
    %93 = vmatprep.subr.mxu0 0.0
    %94 = vmatpush1.msra.mxu0 0.0
    %95 = vmatprep.subr.mxu0 0.0
    %96 = vmatpush1.msra.mxu0 0.0
    %97 = vmatprep.subr.mxu0 0.0
    %98 = vmatpush1.msra.mxu0 0.0
    %99 = vmatprep.subr.mxu0 0.0
    %100 = vmatpush1.msra.mxu0 0.0
    %101 = vmatprep.subr.mxu0 0.0
    %102 = vmatpush1.msra.mxu0 0.0
    %103 = vmatprep.subr.mxu0 0.0
    %104 = vmatpush1.msra.mxu0 0.0
    %105 = vmatprep.subr.mxu0 0.0
    %106 = vmatpush1.msra.mxu0 0.0
    %107 = vmatprep.subr.mxu0 0.0
    %108 = vmatpush1.msra.mxu0 0.0
    %109 = vmatprep.subr.mxu0 0.0
    %110 = vmatpush1.msra.mxu0 0.0
    %111 = vmatprep.subr.mxu0 0.0
    %112 = vmatpush1.msra.mxu0 0.0
    %113 = vmatprep.subr.mxu0 0.0
    %114 = vmatpush1.msra.mxu0 0.0
    %115 = vmatprep.subr.mxu0 0.0
    %116 = vmatpush1.msra.mxu0 0.0
    %117 = vmatprep.subr.mxu0 0.0
    %118 = vmatpush1.msra.mxu0 0.0
    %119 = vmatprep.subr.mxu0 0.0
    %120 = vmatpush1.msra.mxu0 0.0
    %121 = vmatprep.subr.mxu0 0.0
    %122 = vmatpush1.msra.mxu0 0.0
    %123 = vmatprep.subr.mxu0 0.0
    %124 = vmatpush1.msra.mxu0 0.0
    %125 = vmatprep.mubr.f32.mxu0 0.0
    %126 = vmatmul.mubr.f32.gmra.mrb[0].mxu0 %v59
    %v127 = vpop.f32.mrb[0].mxu0
    %v128 = vadd.f32 0.0, %v127
    %v129 = vpop.f32.mrb[0].mxu0
    %v130 = vadd.f32 0.0, %v129
    %131 = vdwg.mxu0
    %132 = vst [vmem:[#allocation8] sm:$0xff] %v128
    %133 = vst [vmem:[#allocation8 + $0x8] sm:$0xff] %v130
    %v134 = vld [vmem:[#allocation5] sm:$0xff]
    %v136 = vsel %vm57, %v134, 0
    %138 = vmatprep.subr.mxu0 %v53
    %139 = vmatpush1.msra.mxu0 %v52
    %140 = vmatprep.subr.mxu0 %v55
    %141 = vmatpush1.msra.mxu0 %v54
    %142 = vmatprep.subr.mxu0 0.0
    %143 = vmatpush1.msra.mxu0 0.0
    %144 = vmatprep.subr.mxu0 0.0
    %145 = vmatpush1.msra.mxu0 0.0
    %146 = vmatprep.subr.mxu0 0.0
    %147 = vmatpush1.msra.mxu0 0.0
    %148 = vmatprep.subr.mxu0 0.0
    %149 = vmatpush1.msra.mxu0 0.0
    %150 = vmatprep.subr.mxu0 0.0
    %151 = vmatpush1.msra.mxu0 0.0
    %152 = vmatprep.subr.mxu0 0.0
    %153 = vmatpush1.msra.mxu0 0.0
    %154 = vmatprep.subr.mxu0 0.0
    %155 = vmatpush1.msra.mxu0 0.0
    %156 = vmatprep.subr.mxu0 0.0
    %157 = vmatpush1.msra.mxu0 0.0
    %158 = vmatprep.subr.mxu0 0.0
    %159 = vmatpush1.msra.mxu0 0.0
    %160 = vmatprep.subr.mxu0 0.0
    %161 = vmatpush1.msra.mxu0 0.0
    %162 = vmatprep.subr.mxu0 0.0
    %163 = vmatpush1.msra.mxu0 0.0
    %164 = vmatprep.subr.mxu0 0.0
    %165 = vmatpush1.msra.mxu0 0.0
    %166 = vmatprep.subr.mxu0 0.0
    %167 = vmatpush1.msra.mxu0 0.0
    %168 = vmatprep.subr.mxu0 0.0
    %169 = vmatpush1.msra.mxu0 0.0
    %170 = vmatprep.subr.mxu0 0.0
    %171 = vmatpush1.msra.mxu0 0.0
    %172 = vmatprep.subr.mxu0 0.0
    %173 = vmatpush1.msra.mxu0 0.0
    %174 = vmatprep.subr.mxu0 0.0
    %175 = vmatpush1.msra.mxu0 0.0
    %176 = vmatprep.subr.mxu0 0.0
    %177 = vmatpush1.msra.mxu0 0.0
    %178 = vmatprep.subr.mxu0 0.0
    %179 = vmatpush1.msra.mxu0 0.0
    %180 = vmatprep.subr.mxu0 0.0
    %181 = vmatpush1.msra.mxu0 0.0
    %182 = vmatprep.subr.mxu0 0.0
    %183 = vmatpush1.msra.mxu0 0.0
    %184 = vmatprep.subr.mxu0 0.0
    %185 = vmatpush1.msra.mxu0 0.0
    %186 = vmatprep.subr.mxu0 0.0
    %187 = vmatpush1.msra.mxu0 0.0
    %188 = vmatprep.subr.mxu0 0.0
    %189 = vmatpush1.msra.mxu0 0.0
    %190 = vmatprep.subr.mxu0 0.0
    %191 = vmatpush1.msra.mxu0 0.0
    %192 = vmatprep.subr.mxu0 0.0
    %193 = vmatpush1.msra.mxu0 0.0
    %194 = vmatprep.subr.mxu0 0.0
    %195 = vmatpush1.msra.mxu0 0.0
    %196 = vmatprep.subr.mxu0 0.0
    %197 = vmatpush1.msra.mxu0 0.0
    %198 = vmatprep.subr.mxu0 0.0
    %199 = vmatpush1.msra.mxu0 0.0
    %200 = vmatprep.subr.mxu0 0.0
    %201 = vmatpush1.msra.mxu0 0.0
    %202 = vmatprep.mubr.f32.mxu0 0.0
    %203 = vmatmul.mubr.f32.gmra.mrb[0].mxu0 %v136
    %v204 = vpop.f32.mrb[0].mxu0
    %v205 = vadd.f32 0.0, %v204
    %v206 = vpop.f32.mrb[0].mxu0
    %v207 = vadd.f32 0.0, %v206
    %208 = vdwg.mxu0
    %s209 = scalar_lea.vmem [#allocation8], 16
    %210 = vst [vmem:[%s209] sm:$0xff] %v205
    %211 = vst [vmem:[%s209 + $0x8] sm:$0xff] %v207
    // Predicated region
    $region26: #{tpu_custom_call.1} parent=1 // pred_check
      _
    $region27: #{tpu_custom_call.1} parent=1 // pred_check_branch
      %213 = sbr.rel (0) target = $region29
    $region28: #{tpu_custom_call.1} parent=1 // pred_region
      %s215 = ssub.s32 512, 512
      %216 = vsyncadd [#allocation4], %s215
      %s217 = sshll.u32 [#allocation8], 4
      %s218 = int_to_ptr.vmem [resolvable:$true] %s217
      %223 = dma.vmem_to_hbm [thread:$0]  %s218, 512, %s3, [#allocation4], 256, 256, 16
    $region29: #{tpu_custom_call.1} parent=1 // pred_fallthru
      _
    // Predicated region
    $region30: #{tpu_custom_call.1} parent=1 // pred_check
      _
    $region31: #{tpu_custom_call.1} parent=1 // pred_check_branch
      %225 = sbr.rel (0) target = $region33
    $region32: #{tpu_custom_call.1} parent=1 // pred_region
      %226 = dma.done [#allocation4], 512
    $region33: #{tpu_custom_call.1} parent=1 // pred_fallthru
      _
    %227 = vsyncpa [#allocation3], 1
    %228 = vsyncpa [#allocation6], 1
    %229 = vsyncpa [#allocation4], 1

</llo_original>
